<compile_context>
chip_gen: v6e
topology: v6e:2x2x1
jax: 0.10.0
libtpu: 0.0.40
codegen_flags: <defaults>
</compile_context>

<pallas_src>
import math

import jax
import jax.numpy as jnp
from jax.experimental import pallas as pl
from jax.experimental.pallas import tpu as pltpu

LANE = 128
SUBLANE = 8


# ---------------------------------------------------------------------------
# Kernel: fused MLP forward on one row-tile.
# refs = (w0, b0, w1, b1, ..., w_{L-1}, b_{L-1}, out_ref)
# ---------------------------------------------------------------------------
def _mlp_kernel(x_ref, *refs):
    out_ref = refs[-1]
    params = refs[:-1]
    num_layers = len(params) // 2

    h = x_ref[...]
    for l in range(num_layers):
        w = params[2 * l][...]
        b = params[2 * l + 1][...]
        # MXU matmul, f32 accumulation; bias broadcast over rows (VPU add).
        h = jnp.dot(h, w, preferred_element_type=jnp.float32) + b.astype(jnp.float32)
        if l != num_layers - 1:
            h = jnp.maximum(h, 0.0)  # ReLU
    out_ref[...] = h.astype(out_ref.dtype)


# ---------------------------------------------------------------------------
# Helpers
# ---------------------------------------------------------------------------
def _round_up(v, m):
    return ((v + m - 1) // m) * m


def _vmem_capacity_bytes():
    """Physical VMEM per TensorCore (generation-aware, conservative fallback)."""
    default = 64 * 1024 * 1024  # v7x per-TC (smallest current generation)
    try:
        info = pltpu.get_tpu_info()
    except Exception:
        return default
    for attr in ("vmem_capacity_bytes", "vmem_size_bytes", "vmem_bytes"):
        v = getattr(info, attr, None)
        if v:
            return int(v)
    return default


def _block_diag(w, p):
    """p copies of w on the block diagonal: (d_i, d_o) -> (p*d_i, p*d_o)."""
    d_i, d_o = w.shape
    out = jnp.zeros((p * d_i, p * d_o), dtype=w.dtype)
    for k in range(p):
        out = out.at[k * d_i:(k + 1) * d_i, k * d_o:(k + 1) * d_o].set(w)
    return out


# ---------------------------------------------------------------------------
# Wrapper
# ---------------------------------------------------------------------------
def mlp_forward(x, weights, biases, *, tile_rows=None, pack=True):
    """Pallas TPU forward pass of the PyTorch MLP module.

    x:       (N, dim_in)
    weights: list of (d_in_l, d_out_l) arrays (already (in, out) layout)
    biases:  list of (d_out_l,) arrays
    """
    assert x.ndim == 2, "expected (N, dim_in)"
    assert len(weights) == len(biases) and len(weights) >= 1
    N, dim_in = x.shape
    assert weights[0].shape[0] == dim_in
    dims = [dim_in] + [w.shape[1] for w in weights]
    dim_out = dims[-1]
    out_dtype = x.dtype

    # --- lane-dense packing: fold p rows into one super-row of p*d lanes.
    #     Only when it keeps packed widths modest and N % p == 0 (so the
    #     reshape is a free, bytes-identical bitcast -- no HBM copy).
    p = 1
    if pack:
        min_io = min(dim_in, dim_out)
        max_d = max(dims)
        p_target = max(1, -(-LANE // min_io))  # ceil(128 / min(dim_in, dim_out))
        for cand in range(p_target, 0, -1):
            if N % cand == 0 and cand * max_d <= 512:
                p = cand
                break

    if p > 1:
        xp = x.reshape(N // p, p * dim_in)                 # free reshape
        wp = [_block_diag(w, p) for w in weights]          # tiny, VMEM-resident
        bp = [jnp.tile(b, p) for b in biases]
    else:
        xp = x
        wp = list(weights)
        bp = list(biases)

    rows, in_w = xp.shape
    out_w = wp[-1].shape[1]
    x_isz = jnp.dtype(xp.dtype).itemsize
    out_isz = jnp.dtype(out_dtype).itemsize

    # --- VMEM accounting (lane-padded) ------------------------------------
    # Resident parameters (count x2 to be safe vs. pipeline buffering).
    w_bytes = 0
    for w, b in zip(wp, bp):
        d_i, d_o = w.shape
        w_bytes += _round_up(d_i, SUBLANE) * _round_up(d_o, LANE) * jnp.dtype(w.dtype).itemsize
        w_bytes += SUBLANE * _round_up(d_o, LANE) * jnp.dtype(b.dtype).itemsize
    w_bytes *= 2

    # Per-row bytes: double-buffered in/out tiles + f32 intermediates.
    act_ws = [_round_up(in_w, LANE)] + [_round_up(w.shape[1], LANE) for w in wp]
    per_row = 2 * act_ws[0] * x_isz + 2 * act_ws[-1] * out_isz
    per_row += sum(act_ws) * 4  # conservative: all f32 intermediates live

    cap = _vmem_capacity_bytes()

    if tile_rows is None:
        budget = int(cap * 0.5) - w_bytes
        tile_rows = max(SUBLANE, budget // max(per_row, 1))
        tile_rows = min(tile_rows, 32768)
        tile_rows = (tile_rows // SUBLANE) * SUBLANE
        # Keep the grid at >= 4 steps so the parallel axis can split across
        # the two TensorCores on v7x (no-op cost on v5e/v6e).
        if rows >= 4 * SUBLANE:
            tile_rows = min(tile_rows, _round_up(-(-rows // 4), SUBLANE))
        tile_rows = min(tile_rows, _round_up(rows, SUBLANE))
    tile_rows = max(SUBLANE, (int(tile_rows) // SUBLANE) * SUBLANE)

    grid = (pl.cdiv(rows, tile_rows),)

    footprint = w_bytes + tile_rows * per_row + (2 << 20)
    vmem_limit = int(max(32 << 20, (footprint * 5) // 4))
    vmem_limit = int(min(vmem_limit, cap - (2 << 20)))
    vmem_limit = max(vmem_limit, 16 << 20)

    # --- specs / operands ---------------------------------------------------
    in_specs = [pl.BlockSpec((tile_rows, in_w), lambda i: (i, 0))]
    operands = [xp]
    for w, b in zip(wp, bp):
        d_i, d_o = w.shape
        in_specs.append(pl.BlockSpec((d_i, d_o), lambda i: (0, 0)))   # resident
        operands.append(w)
        in_specs.append(pl.BlockSpec((1, d_o), lambda i: (0, 0)))     # resident
        operands.append(b.reshape(1, d_o))

    out = pl.pallas_call(
        _mlp_kernel,
        out_shape=jax.ShapeDtypeStruct((rows, out_w), out_dtype),
        grid_spec=pltpu.PrefetchScalarGridSpec(
            num_scalar_prefetch=0,
            grid=grid,
            in_specs=in_specs,
            out_specs=pl.BlockSpec((tile_rows, out_w), lambda i: (i, 0)),
        ),
        compiler_params=pltpu.CompilerParams(
            dimension_semantics=("parallel",),
            vmem_limit_bytes=vmem_limit,
        ),
    )(*operands)

    if p > 1:
        out = out.reshape(N, dim_out)  # free reshape back to (N, dim_out)
    return out


# ---------------------------------------------------------------------------
# Pure-JAX reference (matches PyTorch MLP.forward)
# ---------------------------------------------------------------------------
def mlp_ref(x, weights, biases):
    h = x
    num_layers = len(weights)
    for l in range(num_layers):
        h = h @ weights[l] + biases[l]
        if l != num_layers - 1:
            h = jnp.maximum(h, 0.0)
    return h


# ---------------------------------------------------------------------------
# Demo / correctness check
# ---------------------------------------------------------------------------
if __name__ == "__main__":
    # Module config: MLP(dim_in=32, dim_out=32, dim_hidden=64, num_layers=3)
    dim_in, dim_hidden, dim_out, num_layers = 32, 64, 32, 3
    N = 256  # small batch of points

    key = jax.random.PRNGKey(0)
    keys = jax.random.split(key, 1 + 2 * num_layers)
    x = jax.random.normal(keys[0], (N, dim_in), dtype=jnp.float32)

    # PyTorch nn.Linear-style init, stored as (in, out) + (out,).
    weights, biases = [], []
    for l in range(num_layers):
        d_i = dim_in if l == 0 else dim_hidden
        d_o = dim_out if l == num_layers - 1 else dim_hidden
        bound = 1.0 / math.sqrt(d_i)
        w = jax.random.uniform(keys[1 + 2 * l], (d_i, d_o), jnp.float32, -bound, bound)
        b = jax.random.uniform(keys[2 + 2 * l], (d_o,), jnp.float32, -bound, bound)
        weights.append(w)
        biases.append(b)

    ref = mlp_ref(x, weights, biases)

    # 1) Packed path (p=4 -> lane widths 128/256/128), auto tile (grid of 4).
    out = jax.block_until_ready(mlp_forward(x, weights, biases))
    assert out.shape == (N, dim_out), out.shape
    err = float(jnp.max(jnp.abs(out - ref)))
    assert jnp.allclose(out, ref, atol=1e-2, rtol=1e-2), err

    # 2) Uneven tail: rows not a multiple of the tile -> Pallas clips the
    #    partial edge block (no jnp.pad, no extra HBM copy of x).
    N2 = 200
    out2 = jax.block_until_ready(mlp_forward(x[:N2], weights, biases, tile_rows=16))
    err2 = float(jnp.max(jnp.abs(out2 - ref[:N2])))
    assert out2.shape == (N2, dim_out), out2.shape
    assert jnp.allclose(out2, ref[:N2], atol=1e-2, rtol=1e-2), err2

    print("KERNEL_OK")
</pallas_src>

<mosaic_0001>
module attributes {stable_mosaic.version = 11 : i64} {
  func.func @_mlp_kernel(%arg0: i32, %arg1: memref<16x128xf32, #tpu.memory_space<vmem>>, %arg2: memref<128x256xf32, #tpu.memory_space<vmem>>, %arg3: memref<1x256xf32, #tpu.memory_space<vmem>>, %arg4: memref<256x256xf32, #tpu.memory_space<vmem>>, %arg5: memref<1x256xf32, #tpu.memory_space<vmem>>, %arg6: memref<256x128xf32, #tpu.memory_space<vmem>>, %arg7: memref<1x128xf32, #tpu.memory_space<vmem>>, %arg8: memref<16x128xf32, #tpu.memory_space<vmem>>) attributes {dimension_semantics = [#tpu.dimension_semantics<parallel>], iteration_bounds = array<i64: 4>, scalar_prefetch = 0 : i64, scratch_operands = 0 : i64, tpu.core_type = #tpu.core_type<tc>, window_params = [{transform_indices = @transform_0, window_bounds = array<i64: 16, 128>}, {pipeline_mode = #tpu.pipeline_mode<synchronous>, transform_indices = @transform_1, window_bounds = array<i64: 128, 256>}, {pipeline_mode = #tpu.pipeline_mode<synchronous>, transform_indices = @transform_2, window_bounds = array<i64: 1, 256>}, {pipeline_mode = #tpu.pipeline_mode<synchronous>, transform_indices = @transform_3, window_bounds = array<i64: 256, 256>}, {pipeline_mode = #tpu.pipeline_mode<synchronous>, transform_indices = @transform_4, window_bounds = array<i64: 1, 256>}, {pipeline_mode = #tpu.pipeline_mode<synchronous>, transform_indices = @transform_5, window_bounds = array<i64: 256, 128>}, {pipeline_mode = #tpu.pipeline_mode<synchronous>, transform_indices = @transform_6, window_bounds = array<i64: 1, 128>}, {transform_indices = @transform_7, window_bounds = array<i64: 16, 128>}]} {
    %c0 = arith.constant 0 : index
    %c0_0 = arith.constant 0 : index
    %0 = vector.load %arg1[%c0, %c0_0] : memref<16x128xf32, #tpu.memory_space<vmem>>, vector<16x128xf32>
    %c0_1 = arith.constant 0 : index
    %c0_2 = arith.constant 0 : index
    %1 = vector.load %arg2[%c0_1, %c0_2] : memref<128x256xf32, #tpu.memory_space<vmem>>, vector<128x256xf32>
    %c0_3 = arith.constant 0 : index
    %c0_4 = arith.constant 0 : index
    %2 = vector.load %arg3[%c0_3, %c0_4] : memref<1x256xf32, #tpu.memory_space<vmem>>, vector<1x256xf32>
    %cst = arith.constant dense<0.000000e+00> : vector<16x256xf32>
    %3 = tpu.matmul %0, %1, %cst {dimension_numbers = #tpu.dot_dimension_numbers<[1], [0], [0], [1], [0, 0, 1, 1], [], []>} : vector<16x128xf32>, vector<128x256xf32>, vector<16x256xf32> -> vector<16x256xf32>
    %4 = vector.broadcast %2 : vector<1x256xf32> to vector<16x256xf32>
    %5 = arith.addf %3, %4 : vector<16x256xf32>
    %cst_5 = arith.constant 0.000000e+00 : f32
    %6 = vector.broadcast %cst_5 : f32 to vector<16x256xf32>
    %7 = arith.maximumf %5, %6 : vector<16x256xf32>
    %c0_6 = arith.constant 0 : index
    %c0_7 = arith.constant 0 : index
    %8 = vector.load %arg4[%c0_6, %c0_7] : memref<256x256xf32, #tpu.memory_space<vmem>>, vector<256x256xf32>
    %c0_8 = arith.constant 0 : index
    %c0_9 = arith.constant 0 : index
    %9 = vector.load %arg5[%c0_8, %c0_9] : memref<1x256xf32, #tpu.memory_space<vmem>>, vector<1x256xf32>
    %cst_10 = arith.constant dense<0.000000e+00> : vector<16x256xf32>
    %10 = tpu.matmul %7, %8, %cst_10 {dimension_numbers = #tpu.dot_dimension_numbers<[1], [0], [0], [1], [0, 0, 1, 1], [], []>} : vector<16x256xf32>, vector<256x256xf32>, vector<16x256xf32> -> vector<16x256xf32>
    %11 = vector.broadcast %9 : vector<1x256xf32> to vector<16x256xf32>
    %12 = arith.addf %10, %11 : vector<16x256xf32>
    %cst_11 = arith.constant 0.000000e+00 : f32
    %13 = vector.broadcast %cst_11 : f32 to vector<16x256xf32>
    %14 = arith.maximumf %12, %13 : vector<16x256xf32>
    %c0_12 = arith.constant 0 : index
    %c0_13 = arith.constant 0 : index
    %15 = vector.load %arg6[%c0_12, %c0_13] : memref<256x128xf32, #tpu.memory_space<vmem>>, vector<256x128xf32>
    %c0_14 = arith.constant 0 : index
    %c0_15 = arith.constant 0 : index
    %16 = vector.load %arg7[%c0_14, %c0_15] : memref<1x128xf32, #tpu.memory_space<vmem>>, vector<1x128xf32>
    %cst_16 = arith.constant dense<0.000000e+00> : vector<16x128xf32>
    %17 = tpu.matmul %14, %15, %cst_16 {dimension_numbers = #tpu.dot_dimension_numbers<[1], [0], [0], [1], [0, 0, 1, 1], [], []>} : vector<16x256xf32>, vector<256x128xf32>, vector<16x128xf32> -> vector<16x128xf32>
    %18 = vector.broadcast %16 : vector<1x128xf32> to vector<16x128xf32>
    %19 = arith.addf %17, %18 : vector<16x128xf32>
    %c0_17 = arith.constant 0 : index
    %c0_18 = arith.constant 0 : index
    %20 = vector.load %arg8[%c0_17, %c0_18] : memref<16x128xf32, #tpu.memory_space<vmem>>, vector<16x128xf32>
    tpu.vector_store %arg8[%c0_17, %c0_18], %19 {strides = array<i32>} : memref<16x128xf32, #tpu.memory_space<vmem>>, vector<16x128xf32>,
    return
  }
  func.func @transform_0(%arg0: i32) -> (i32, i32) {
    %c0_i32 = arith.constant 0 : i32
    %c0_i32_0 = arith.constant 0 : i32
    return %arg0, %c0_i32 : i32, i32
  }
  func.func @transform_1(%arg0: i32) -> (i32, i32) {
    %c0_i32 = arith.constant 0 : i32
    %c0_i32_0 = arith.constant 0 : i32
    %c0_i32_1 = arith.constant 0 : i32
    return %c0_i32, %c0_i32_0 : i32, i32
  }
  func.func @transform_2(%arg0: i32) -> (i32, i32) {
    %c0_i32 = arith.constant 0 : i32
    %c0_i32_0 = arith.constant 0 : i32
    %c0_i32_1 = arith.constant 0 : i32
    return %c0_i32, %c0_i32_0 : i32, i32
  }
  func.func @transform_3(%arg0: i32) -> (i32, i32) {
    %c0_i32 = arith.constant 0 : i32
    %c0_i32_0 = arith.constant 0 : i32
    %c0_i32_1 = arith.constant 0 : i32
    return %c0_i32, %c0_i32_0 : i32, i32
  }
  func.func @transform_4(%arg0: i32) -> (i32, i32) {
    %c0_i32 = arith.constant 0 : i32
    %c0_i32_0 = arith.constant 0 : i32
    %c0_i32_1 = arith.constant 0 : i32
    return %c0_i32, %c0_i32_0 : i32, i32
  }
  func.func @transform_5(%arg0: i32) -> (i32, i32) {
    %c0_i32 = arith.constant 0 : i32
    %c0_i32_0 = arith.constant 0 : i32
    %c0_i32_1 = arith.constant 0 : i32
    return %c0_i32, %c0_i32_0 : i32, i32
  }
  func.func @transform_6(%arg0: i32) -> (i32, i32) {
    %c0_i32 = arith.constant 0 : i32
    %c0_i32_0 = arith.constant 0 : i32
    %c0_i32_1 = arith.constant 0 : i32
    return %c0_i32, %c0_i32_0 : i32, i32
  }
  func.func @transform_7(%arg0: i32) -> (i32, i32) {
    %c0_i32 = arith.constant 0 : i32
    %c0_i32_0 = arith.constant 0 : i32
    return %arg0, %c0_i32 : i32, i32
  }
}

</mosaic_0001>

<llo_original>
// kernel: tpu_custom_call.1
$region0: #{tpu_custom_call.1}
  #allocation0 [shape = 'u32[]', space=smem, size = 0x4, offset = 0x4, fixed_abs, tag = 'smem constant byte address 0x4 - core index']
  #allocation1 [shape = 'u32[144,128]{1,0:T(1,128)}', space=vmem, size = 0x12000, scoped, tag = 'internal scratch']
  %s0 = inlined_call_operand.hbm [shape: f32[64,128], index: 0, kind: input, shape index: {}]
  %s1 = inlined_call_operand.hbm [shape: f32[128,256], index: 1, kind: input, shape index: {}]
  %s2 = inlined_call_operand.vmem [shape: f32[1,256], index: 2, kind: input, shape index: {}]
  %s3 = inlined_call_operand.hbm [shape: f32[256,256], index: 3, kind: input, shape index: {}]
  %s4 = inlined_call_operand.vmem [shape: f32[1,256], index: 4, kind: input, shape index: {}]
  %s5 = inlined_call_operand.hbm [shape: f32[256,128], index: 5, kind: input, shape index: {}]
  %s6 = inlined_call_operand.vmem [shape: f32[1,128], index: 6, kind: input, shape index: {}]
  %s7 = inlined_call_operand.hbm [shape: f32[64,128], index: 7, kind: output, shape index: {}]
  %s8 = sld [smem:[#allocation0]]
  $region77: #{tpu_custom_call.1} parent=0
    _
  %s10 = ssub.s32 1, %s8
  %s11 = scalar_select 0, %s10, %s8
  $region1: #{tpu_custom_call.1} parent=0
    #allocation2 [shape = 'u8[16384]{0}', space=vmem, size = 0x4000, scoped, tag = 'input window, operand 0']
    #allocation3 [shape = 's32[2]{0}', space=sflag, size = 0x8, scoped, tag = 'scoped memory for tpu_custom_call.1']
    #allocation4 [shape = 's32[2]{0}', space=sflag, size = 0x8, scoped, tag = 'scoped memory for tpu_custom_call.1']
    #allocation5 [shape = 'u8[131072]{0}', space=vmem, size = 0x20000, scoped, tag = 'input window, operand 1, single buffered']
    #allocation6 [shape = 's32[1]{0}', space=sflag, size = 0x4, scoped, tag = 'scoped memory for tpu_custom_call.1']
    #allocation7 [shape = 'u8[262144]{0}', space=vmem, size = 0x40000, scoped, tag = 'input window, operand 3, single buffered']
    #allocation8 [shape = 'u8[131072]{0}', space=vmem, size = 0x20000, scoped, tag = 'input window, operand 5, single buffered']
    #allocation9 [shape = 's32[1]{0}', space=sflag, size = 0x4, scoped, tag = 'scoped memory for tpu_custom_call.1']
    #allocation10 [shape = 'u8[16384]{0}', space=vmem, size = 0x4000, scoped, tag = 'output window, operand 0']
    %12 = vsyncpa [#allocation3], 0
    %s13 = scalar_lea.sflag [#allocation3], 1
    %14 = vsyncpa %s13, 0
    %15 = vsyncpa [#allocation6], 0
    %16 = vsyncpa [#allocation9], 0
    %17 = vsyncpa [#allocation4], 0
    %s18 = scalar_lea.sflag [#allocation4], 1
    %19 = vsyncpa %s18, 0
    loop: start=0, step=1, limit=6
    $region2: #{tpu_custom_call.1} parent=1 // loop_pre_header
      _
    $region3: #{tpu_custom_call.1} parent=1 // loop_header
      %s21 = sphi 0, %s25
      %p22 = scmp.ge.s32.totalorder %s21, 6
      %s31 = sphi 0, %s33
      %s34 = sphi 0, %s31
      %s35 = sphi 0, %s34
      %s51 = sphi 0, %s35
      %s55 = sphi 0, %s55
      %s57 = sphi 0, %s55
      %s58 = sphi 0, %s57
      %s72 = sphi 0, %s58
      %s76 = sphi 0, %s76
      %s78 = sphi 0, %s76
      %s79 = sphi 0, %s78
      %s93 = sphi 0, %s79
      %s97 = sphi 0, %s97
      %s99 = sphi 0, %s97
      %s100 = sphi 0, %s99
      %s114 = sphi 0, %s100
      %s118 = sphi 0, %s118
      %s120 = sphi 0, %s118
      %s121 = sphi 0, %s120
      %s135 = sphi 0, %s121
      %s139 = sphi 0, %s139
      %s141 = sphi 0, %s139
      %s142 = sphi 0, %s141
      %s156 = sphi 0, %s142
      %s160 = sphi 0, %s160
      %s162 = sphi 0, %s160
      %s163 = sphi 0, %s162
      %s177 = sphi 0, %s163
      %s183 = sphi 0, %s185
      %s186 = sphi 0, %s183
      %s187 = sphi 0, %s186
      %s203 = sphi 0, %s187
    $region4: #{tpu_custom_call.1} parent=1 // loop_header_branch
      %24 = sbr.rel (%p22) target = $region8
    $region5: #{tpu_custom_call.1} parent=1 // loop_body
      %s26 = ssub.s32 %s21, 1
      %s27 = ssub.s32 %s21, 2
      %s28 = sadd.s32 %s21, 1
      %s29 = ssub.s32 %s21, %s28
      %p30 = scmp.eq.s32.totalorder %s29, 0
      %s32 = sadd.s32 %s31, 1
      %s33 = scalar_select %p30, %s31, %s32
      %p36 = pneg %p30
      %p37 = scmp.eq.s32.totalorder %s21, 3
      %p38 = por %p36, %p37
      %p39 = scmp.ne.s32.totalorder %s31, %s34
      %p40 = scmp.eq.s32.totalorder %s21, 0
      %p41 = por %p39, %p40
      %p42 = scmp.ne.s32.totalorder %s31, %s34
      %p43 = scmp.eq.s32.totalorder %s26, 3
      %p44 = por %p42, %p43
      %p45 = scmp.ne.s32.totalorder %s34, %s35
      %p46 = scmp.eq.s32.totalorder %s26, 0
      %p47 = por %p45, %p46
      %p48 = scmp.ne.s32.totalorder %s34, %s35
      %p49 = scmp.eq.s32.totalorder %s27, 3
      %p50 = por %p48, %p49
      %p52 = scmp.ne.s32.totalorder %s35, %s51
      %p53 = scmp.eq.s32.totalorder %s27, 0
      %p54 = por %p52, %p53
      %s56 = sadd.s32 %s55, 1
      %p59 = scmp.eq.s32.totalorder %s21, 3
      %p60 = scmp.ne.s32.totalorder %s55, %s57
      %p61 = scmp.eq.s32.totalorder %s21, 0
      %p62 = por %p60, %p61
      %p63 = scmp.ne.s32.totalorder %s55, %s57
      %p64 = scmp.eq.s32.totalorder %s26, 3
      %p65 = por %p63, %p64
      %p66 = scmp.ne.s32.totalorder %s57, %s58
      %p67 = scmp.eq.s32.totalorder %s26, 0
      %p68 = por %p66, %p67
      %p69 = scmp.ne.s32.totalorder %s57, %s58
      %p70 = scmp.eq.s32.totalorder %s27, 3
      %p71 = por %p69, %p70
      %p73 = scmp.ne.s32.totalorder %s58, %s72
      %p74 = scmp.eq.s32.totalorder %s27, 0
      %p75 = por %p73, %p74
      %s77 = sadd.s32 %s76, 1
      %p80 = scmp.eq.s32.totalorder %s21, 3
      %p81 = scmp.ne.s32.totalorder %s76, %s78
      %p82 = scmp.eq.s32.totalorder %s21, 0
      %p83 = por %p81, %p82
      %p84 = scmp.ne.s32.totalorder %s76, %s78
      %p85 = scmp.eq.s32.totalorder %s26, 3
      %p86 = por %p84, %p85
      %p87 = scmp.ne.s32.totalorder %s78, %s79
      %p88 = scmp.eq.s32.totalorder %s26, 0
      %p89 = por %p87, %p88
      %p90 = scmp.ne.s32.totalorder %s78, %s79
      %p91 = scmp.eq.s32.totalorder %s27, 3
      %p92 = por %p90, %p91
      %p94 = scmp.ne.s32.totalorder %s79, %s93
      %p95 = scmp.eq.s32.totalorder %s27, 0
      %p96 = por %p94, %p95
      %s98 = sadd.s32 %s97, 1
      %p101 = scmp.eq.s32.totalorder %s21, 3
      %p102 = scmp.ne.s32.totalorder %s97, %s99
      %p103 = scmp.eq.s32.totalorder %s21, 0
      %p104 = por %p102, %p103
      %p105 = scmp.ne.s32.totalorder %s97, %s99
      %p106 = scmp.eq.s32.totalorder %s26, 3
      %p107 = por %p105, %p106
      %p108 = scmp.ne.s32.totalorder %s99, %s100
      %p109 = scmp.eq.s32.totalorder %s26, 0
      %p110 = por %p108, %p109
      %p111 = scmp.ne.s32.totalorder %s99, %s100
      %p112 = scmp.eq.s32.totalorder %s27, 3
      %p113 = por %p111, %p112
      %p115 = scmp.ne.s32.totalorder %s100, %s114
      %p116 = scmp.eq.s32.totalorder %s27, 0
      %p117 = por %p115, %p116
      %s119 = sadd.s32 %s118, 1
      %p122 = scmp.eq.s32.totalorder %s21, 3
      %p123 = scmp.ne.s32.totalorder %s118, %s120
      %p124 = scmp.eq.s32.totalorder %s21, 0
      %p125 = por %p123, %p124
      %p126 = scmp.ne.s32.totalorder %s118, %s120
      %p127 = scmp.eq.s32.totalorder %s26, 3
      %p128 = por %p126, %p127
      %p129 = scmp.ne.s32.totalorder %s120, %s121
      %p130 = scmp.eq.s32.totalorder %s26, 0
      %p131 = por %p129, %p130
      %p132 = scmp.ne.s32.totalorder %s120, %s121
      %p133 = scmp.eq.s32.totalorder %s27, 3
      %p134 = por %p132, %p133
      %p136 = scmp.ne.s32.totalorder %s121, %s135
      %p137 = scmp.eq.s32.totalorder %s27, 0
      %p138 = por %p136, %p137
      %s140 = sadd.s32 %s139, 1
      %p143 = scmp.eq.s32.totalorder %s21, 3
      %p144 = scmp.ne.s32.totalorder %s139, %s141
      %p145 = scmp.eq.s32.totalorder %s21, 0
      %p146 = por %p144, %p145
      %p147 = scmp.ne.s32.totalorder %s139, %s141
      %p148 = scmp.eq.s32.totalorder %s26, 3
      %p149 = por %p147, %p148
      %p150 = scmp.ne.s32.totalorder %s141, %s142
      %p151 = scmp.eq.s32.totalorder %s26, 0
      %p152 = por %p150, %p151
      %p153 = scmp.ne.s32.totalorder %s141, %s142
      %p154 = scmp.eq.s32.totalorder %s27, 3
      %p155 = por %p153, %p154
      %p157 = scmp.ne.s32.totalorder %s142, %s156
      %p158 = scmp.eq.s32.totalorder %s27, 0
      %p159 = por %p157, %p158
      %s161 = sadd.s32 %s160, 1
      %p164 = scmp.eq.s32.totalorder %s21, 3
      %p165 = scmp.ne.s32.totalorder %s160, %s162
      %p166 = scmp.eq.s32.totalorder %s21, 0
      %p167 = por %p165, %p166
      %p168 = scmp.ne.s32.totalorder %s160, %s162
      %p169 = scmp.eq.s32.totalorder %s26, 3
      %p170 = por %p168, %p169
      %p171 = scmp.ne.s32.totalorder %s162, %s163
      %p172 = scmp.eq.s32.totalorder %s26, 0
      %p173 = por %p171, %p172
      %p174 = scmp.ne.s32.totalorder %s162, %s163
      %p175 = scmp.eq.s32.totalorder %s27, 3
      %p176 = por %p174, %p175
      %p178 = scmp.ne.s32.totalorder %s163, %s177
      %p179 = scmp.eq.s32.totalorder %s27, 0
      %p180 = por %p178, %p179
      %s181 = ssub.s32 %s21, %s28
      %p182 = scmp.eq.s32.totalorder %s181, 0
      %s184 = sadd.s32 %s183, 1
      %s185 = scalar_select %p182, %s183, %s184
      %p188 = pneg %p182
      %p189 = scmp.eq.s32.totalorder %s21, 3
      %p190 = por %p188, %p189
      %p191 = scmp.ne.s32.totalorder %s183, %s186
      %p192 = scmp.eq.s32.totalorder %s21, 0
      %p193 = por %p191, %p192
      %p194 = scmp.ne.s32.totalorder %s183, %s186
      %p195 = scmp.eq.s32.totalorder %s26, 3
      %p196 = por %p194, %p195
      %p197 = scmp.ne.s32.totalorder %s186, %s187
      %p198 = scmp.eq.s32.totalorder %s26, 0
      %p199 = por %p197, %p198
      %p200 = scmp.ne.s32.totalorder %s186, %s187
      %p201 = scmp.eq.s32.totalorder %s27, 3
      %p202 = por %p200, %p201
      %p204 = scmp.ne.s32.totalorder %s187, %s203
      %p205 = scmp.eq.s32.totalorder %s27, 0
      %p206 = por %p204, %p205
      %p207 = scmp.le.s32.totalorder 1, %s21
      %p208 = scmp.lt.s32.totalorder %s21, 5
      %p209 = pnand %p207, %p208
      %p210 = pneg %p209
      // Predicated region
      $region9: #{tpu_custom_call.1} parent=5 // pred_check
        _
      $region10: #{tpu_custom_call.1} parent=5 // pred_check_branch
        %212 = sbr.rel (%p209) target = $region12
      $region11: #{tpu_custom_call.1} parent=5 // pred_region
        %s213 = ssub.s32 %s21, 1
        // Predicated region
        $region13: #{tpu_custom_call.1} parent=11 // pred_check
          %p214 = pneg %p68
        $region14: #{tpu_custom_call.1} parent=11 // pred_check_branch
          %216 = sbr.rel (%p214) target = $region16
        $region15: #{tpu_custom_call.1} parent=11 // pred_region
          %s218 = ssub.s32 4096, 4096
          %219 = vsyncadd [#allocation6], %s218
          %s220 = sshll.u32 [#allocation5], 4
          %s221 = int_to_ptr.vmem [resolvable:$true] %s220
          %226 = dma.hbm_to_vmem [thread:$0]  %s1, 4096, %s221, [#allocation6], 256, 256, 16
        $region16: #{tpu_custom_call.1} parent=11 // pred_fallthru
          _
        // Predicated region
        $region17: #{tpu_custom_call.1} parent=11 // pred_check
          %p227 = pneg %p89
        $region18: #{tpu_custom_call.1} parent=11 // pred_check_branch
          %229 = sbr.rel (%p227) target = $region20
        $region19: #{tpu_custom_call.1} parent=11 // pred_region
          _
        $region20: #{tpu_custom_call.1} parent=11 // pred_fallthru
          _
        // Predicated region
        $region21: #{tpu_custom_call.1} parent=11 // pred_check
          %p230 = pneg %p110
        $region22: #{tpu_custom_call.1} parent=11 // pred_check_branch
          %232 = sbr.rel (%p230) target = $region24
        $region23: #{tpu_custom_call.1} parent=11 // pred_region
          %s234 = ssub.s32 8192, 8192
          %235 = vsyncadd [#allocation6], %s234
          %s236 = sshll.u32 [#allocation7], 4
          %s237 = int_to_ptr.vmem [resolvable:$true] %s236
          %242 = dma.hbm_to_vmem [thread:$0]  %s3, 8192, %s237, [#allocation6], 256, 256, 16
        $region24: #{tpu_custom_call.1} parent=11 // pred_fallthru
          _
        // Predicated region
        $region25: #{tpu_custom_call.1} parent=11 // pred_check
          %p243 = pneg %p131
        $region26: #{tpu_custom_call.1} parent=11 // pred_check_branch
          %245 = sbr.rel (%p243) target = $region28
        $region27: #{tpu_custom_call.1} parent=11 // pred_region
          _
        $region28: #{tpu_custom_call.1} parent=11 // pred_fallthru
          _
        // Predicated region
        $region29: #{tpu_custom_call.1} parent=11 // pred_check
          %p246 = pneg %p152
        $region30: #{tpu_custom_call.1} parent=11 // pred_check_branch
          %248 = sbr.rel (%p246) target = $region32
        $region31: #{tpu_custom_call.1} parent=11 // pred_region
          %s250 = ssub.s32 4096, 4096
          %251 = vsyncadd [#allocation9], %s250
          %s252 = sshll.u32 [#allocation8], 4
          %s253 = int_to_ptr.vmem [resolvable:$true] %s252
          %258 = dma.hbm_to_vmem [thread:$0]  %s5, 4096, %s253, [#allocation9], 128, 128, 8
        $region32: #{tpu_custom_call.1} parent=11 // pred_fallthru
          _
        // Predicated region
        $region33: #{tpu_custom_call.1} parent=11 // pred_check
          %p259 = pneg %p173
        $region34: #{tpu_custom_call.1} parent=11 // pred_check_branch
          %261 = sbr.rel (%p259) target = $region36
        $region35: #{tpu_custom_call.1} parent=11 // pred_region
          _
        $region36: #{tpu_custom_call.1} parent=11 // pred_fallthru
          _
      $region12: #{tpu_custom_call.1} parent=5 // pred_fallthru
        _
      %p262 = scmp.lt.s32.totalorder %s21, 4
      // Predicated region
      $region37: #{tpu_custom_call.1} parent=5 // pred_check
        %p263 = pneg %p262
      $region38: #{tpu_custom_call.1} parent=5 // pred_check_branch
        %265 = sbr.rel (%p263) target = $region40
      $region39: #{tpu_custom_call.1} parent=5 // pred_region
        // Predicated region
        $region41: #{tpu_custom_call.1} parent=39 // pred_check
          %p266 = pneg %p41
        $region42: #{tpu_custom_call.1} parent=39 // pred_check_branch
          %268 = sbr.rel (%p266) target = $region44
        $region43: #{tpu_custom_call.1} parent=39 // pred_region
          %s269 = sand.u32 %s31, 1
          %s270 = scalar_lea.sflag [#allocation3], %s269
          %s271 = sand.u32 %s31, 1
          %s272 = smul.addr %s271, 16
          %s273 = scalar_lea.vmem [#allocation2], %s272
          %s274 = smul.u32 2, %s21
          %s276 = ssub.s32 256, 256
          %277 = vsyncadd %s270, %s276
          %s278 = smul.addr %s274, 128
          %s279 = scalar_lea.hbm %s0, %s278
          %s280 = sshll.u32 %s273, 4
          %s281 = int_to_ptr.vmem [resolvable:$true] %s280
          %286 = dma.hbm_to_vmem [thread:$0]  %s279, 256, %s281, %s270, 128, 128, 8
        $region44: #{tpu_custom_call.1} parent=39 // pred_fallthru
          _
      $region40: #{tpu_custom_call.1} parent=5 // pred_fallthru
        _
      %p287 = scmp.le.s32.totalorder 1, %s21
      %p288 = scmp.lt.s32.totalorder %s21, 5
      %p289 = pnand %p287, %p288
      %p290 = pneg %p289
      // Predicated region
      $region45: #{tpu_custom_call.1} parent=5 // pred_check
        _
      $region46: #{tpu_custom_call.1} parent=5 // pred_check_branch
        %292 = sbr.rel (%p289) target = $region48
      $region47: #{tpu_custom_call.1} parent=5 // pred_region
        %s293 = ssub.s32 %s21, 1
        %s294 = sand.u32 %s34, 1
        %s295 = scalar_lea.sflag [#allocation3], %s294
        %s296 = sand.u32 %s34, 1
        %s297 = smul.addr %s296, 16
        %s298 = scalar_lea.vmem [#allocation2], %s297
        // Predicated region
        $region49: #{tpu_custom_call.1} parent=47 // pred_check
          %p299 = pneg %p47
        $region50: #{tpu_custom_call.1} parent=47 // pred_check_branch
          %301 = sbr.rel (%p299) target = $region52
        $region51: #{tpu_custom_call.1} parent=47 // pred_region
          %302 = dma.done %s295, 256
        $region52: #{tpu_custom_call.1} parent=47 // pred_fallthru
          _
        // Predicated region
        $region53: #{tpu_custom_call.1} parent=47 // pred_check
          %p303 = pneg %p68
        $region54: #{tpu_custom_call.1} parent=47 // pred_check_branch
          %305 = sbr.rel (%p303) target = $region56
        $region55: #{tpu_custom_call.1} parent=47 // pred_region
          %306 = dma.done [#allocation6], 4096
        $region56: #{tpu_custom_call.1} parent=47 // pred_fallthru
          _
        // Predicated region
        $region57: #{tpu_custom_call.1} parent=47 // pred_check
          %p307 = pneg %p110
        $region58: #{tpu_custom_call.1} parent=47 // pred_check_branch
          %309 = sbr.rel (%p307) target = $region60
        $region59: #{tpu_custom_call.1} parent=47 // pred_region
          %310 = dma.done [#allocation6], 8192
        $region60: #{tpu_custom_call.1} parent=47 // pred_fallthru
          _
        // Predicated region
        $region61: #{tpu_custom_call.1} parent=47 // pred_check
          %p311 = pneg %p152
        $region62: #{tpu_custom_call.1} parent=47 // pred_check_branch
          %313 = sbr.rel (%p311) target = $region64
        $region63: #{tpu_custom_call.1} parent=47 // pred_region
          %314 = dma.done [#allocation9], 4096
        $region64: #{tpu_custom_call.1} parent=47 // pred_fallthru
          _
        %s315 = sand.u32 %s34, 1
        %s316 = scalar_lea.sflag [#allocation3], %s315
        %s317 = sand.u32 %s34, 1
        %s318 = smul.addr %s317, 16
        %s319 = scalar_lea.vmem [#allocation2], %s318
        %p320 = pneg %p47
        %p321 = pneg %p44
        %p322 = pneg %p68
        %p323 = pneg %p65
        %p324 = pneg %p89
        %p325 = pneg %p86
        %p326 = pneg %p110
        %p327 = pneg %p107
        %p328 = pneg %p131
        %p329 = pneg %p128
        %p330 = pneg %p152
        %p331 = pneg %p149
        %p332 = pneg %p173
        %p333 = pneg %p170
        %p334 = pneg %p199
        %p335 = pneg %p196
        %s336 = sand.u32 %s186, 1
        %s337 = scalar_lea.sflag [#allocation4], %s336
        %s338 = sand.u32 %s186, 1
        %s339 = smul.addr %s338, 16
        %s340 = scalar_lea.vmem [#allocation10], %s339
        %s341 = smul.u32 2, %s26
        %s342 = smul.u32 2, %s26
        %v343 = vld [vmem:[%s298] sm:$0xff]
        %v344 = vld [vmem:[%s298 + $0x8] sm:$0xff]
        %v345 = vld [vmem:[#allocation5] sm:$0xff]
        %v346 = vld [vmem:[#allocation5 + $0x8] sm:$0xff]
        %v347 = vld [vmem:[#allocation5 + $0x10] sm:$0xff]
        %v348 = vld [vmem:[#allocation5 + $0x18] sm:$0xff]
        %v349 = vld [vmem:[#allocation5 + $0x20] sm:$0xff]
        %v350 = vld [vmem:[#allocation5 + $0x28] sm:$0xff]
        %v351 = vld [vmem:[#allocation5 + $0x30] sm:$0xff]
        %v352 = vld [vmem:[#allocation5 + $0x38] sm:$0xff]
        %v353 = vld [vmem:[#allocation5 + $0x40] sm:$0xff]
        %v354 = vld [vmem:[#allocation5 + $0x48] sm:$0xff]
        %v355 = vld [vmem:[#allocation5 + $0x50] sm:$0xff]
        %v356 = vld [vmem:[#allocation5 + $0x58] sm:$0xff]
        %v357 = vld [vmem:[#allocation5 + $0x60] sm:$0xff]
        %v358 = vld [vmem:[#allocation5 + $0x68] sm:$0xff]
        %v359 = vld [vmem:[#allocation5 + $0x70] sm:$0xff]
        %v360 = vld [vmem:[#allocation5 + $0x78] sm:$0xff]
        %v361 = vld [vmem:[#allocation5 + $0x80] sm:$0xff]
        %v362 = vld [vmem:[#allocation5 + $0x88] sm:$0xff]
        %v363 = vld [vmem:[#allocation5 + $0x90] sm:$0xff]
        %v364 = vld [vmem:[#allocation5 + $0x98] sm:$0xff]
        %v365 = vld [vmem:[#allocation5 + $0xa0] sm:$0xff]
        %v366 = vld [vmem:[#allocation5 + $0xa8] sm:$0xff]
        %v367 = vld [vmem:[#allocation5 + $0xb0] sm:$0xff]
        %v368 = vld [vmem:[#allocation5 + $0xb8] sm:$0xff]
        %v369 = vld [vmem:[#allocation5 + $0xc0] sm:$0xff]
        %v370 = vld [vmem:[#allocation5 + $0xc8] sm:$0xff]
        %v371 = vld [vmem:[#allocation5 + $0xd0] sm:$0xff]
        %v372 = vld [vmem:[#allocation5 + $0xd8] sm:$0xff]
        %v373 = vld [vmem:[#allocation5 + $0xe0] sm:$0xff]
        %v374 = vld [vmem:[#allocation5 + $0xe8] sm:$0xff]
        %v375 = vld [vmem:[#allocation5 + $0xf0] sm:$0xff]
        %v376 = vld [vmem:[#allocation5 + $0xf8] sm:$0xff]
        %v377 = vld [vmem:[%s2] sm:$0x3]
        %v379 = vlaneseq
        %v380 = vshrl.u32 %v379, 7
        %v381 = vsub.s32 0, %v380
        %v382 = vrot.slane %v377, %v381
        %v383 = vlaneseq
        %v384 = vshrl.u32 %v383, 7
        %v385 = vsub.s32 1, %v384
        %v386 = vrot.slane %v377, %v385
        %389 = vmatprep.subr.mxu0 %v376
        %390 = vmatpush1.msra.mxu0 %v375
        %391 = vmatprep.subr.mxu0 %v374
        %392 = vmatpush1.msra.mxu0 %v373
        %393 = vmatprep.subr.mxu0 %v372
        %394 = vmatpush1.msra.mxu0 %v371
        %395 = vmatprep.subr.mxu0 %v370
        %396 = vmatpush1.msra.mxu0 %v369
        %397 = vmatprep.subr.mxu0 %v368
        %398 = vmatpush1.msra.mxu0 %v367
        %399 = vmatprep.subr.mxu0 %v366
        %400 = vmatpush1.msra.mxu0 %v365
        %401 = vmatprep.subr.mxu0 %v364
        %402 = vmatpush1.msra.mxu0 %v363
        %403 = vmatprep.subr.mxu0 %v362
        %404 = vmatpush1.msra.mxu0 %v361
        %405 = vmatprep.subr.mxu0 %v360
        %406 = vmatpush1.msra.mxu0 %v359
        %407 = vmatprep.subr.mxu0 %v358
        %408 = vmatpush1.msra.mxu0 %v357
        %409 = vmatprep.subr.mxu0 %v356
        %410 = vmatpush1.msra.mxu0 %v355
        %411 = vmatprep.subr.mxu0 %v354
        %412 = vmatpush1.msra.mxu0 %v353
        %413 = vmatprep.subr.mxu0 %v352
        %414 = vmatpush1.msra.mxu0 %v351
        %415 = vmatprep.subr.mxu0 %v350
        %416 = vmatpush1.msra.mxu0 %v349
        %417 = vmatprep.subr.mxu0 %v348
        %418 = vmatpush1.msra.mxu0 %v347
        %419 = vmatprep.subr.mxu0 %v346
        %420 = vmatpush1.msra.mxu0 %v345
        %421 = vmatprep.subr.mxu0 0.0
        %422 = vmatpush2.msra.mxu0 0.0
        %423 = vmatprep.subr.mxu0 0.0
        %424 = vmatpush2.msra.mxu0 0.0
        %425 = vmatprep.subr.mxu0 0.0
        %426 = vmatpush2.msra.mxu0 0.0
        %427 = vmatprep.subr.mxu0 0.0
        %428 = vmatpush2.msra.mxu0 0.0
        %429 = vmatprep.subr.mxu0 0.0
        %430 = vmatpush2.msra.mxu0 0.0
        %431 = vmatprep.subr.mxu0 0.0
        %432 = vmatpush2.msra.mxu0 0.0
        %433 = vmatprep.subr.mxu0 0.0
        %434 = vmatpush2.msra.mxu0 0.0
        %435 = vmatprep.subr.mxu0 0.0
        %436 = vmatpush2.msra.mxu0 0.0
        %437 = vmatprep.subr.mxu0 0.0
        %438 = vmatpush2.msra.mxu0 0.0
        %439 = vmatprep.subr.mxu0 0.0
        %440 = vmatpush2.msra.mxu0 0.0
        %441 = vmatprep.subr.mxu0 0.0
        %442 = vmatpush2.msra.mxu0 0.0
        %443 = vmatprep.subr.mxu0 0.0
        %444 = vmatpush2.msra.mxu0 0.0
        %445 = vmatprep.subr.mxu0 0.0
        %446 = vmatpush2.msra.mxu0 0.0
        %447 = vmatprep.subr.mxu0 0.0
        %448 = vmatpush2.msra.mxu0 0.0
        %449 = vmatprep.subr.mxu0 0.0
        %450 = vmatpush2.msra.mxu0 0.0
        %451 = vmatprep.subr.mxu0 0.0
        %452 = vmatpush2.msra.mxu0 0.0
        %453 = vmatprep.mubr.f32.mxu0 0.0
        %454 = vmatmul.mubr.f32.gmra.mxu0 %v343
        %v455 = vpop.f32.mrf.mxu0
        %v456 = vadd.f32 %v382, %v455
        %v457 = vpop.f32.mrf.mxu0
        %v458 = vadd.f32 %v386, %v457
        %459 = vmatprep.mubr.f32.mxu0 0.0
        %460 = vmatmul.mubr.f32.gmra.mxu0 %v344
        %v461 = vpop.f32.mrf.mxu0
        %v462 = vadd.f32 %v382, %v461
        %v463 = vpop.f32.mrf.mxu0
        %v464 = vadd.f32 %v386, %v463
        %465 = vdwg.mxu0
        %v466 = vmax.f32 %v456, 0.0
        %v467 = vmax.f32 %v458, 0.0
        %v468 = vmax.f32 %v462, 0.0
        %v469 = vmax.f32 %v464, 0.0
        %v470 = vld [vmem:[#allocation7] sm:$0xff]
        %v471 = vld [vmem:[#allocation7 + $0x8] sm:$0xff]
        %v472 = vld [vmem:[#allocation7 + $0x10] sm:$0xff]
        %v473 = vld [vmem:[#allocation7 + $0x18] sm:$0xff]
        %v474 = vld [vmem:[#allocation7 + $0x20] sm:$0xff]
        %v475 = vld [vmem:[#allocation7 + $0x28] sm:$0xff]
        %v476 = vld [vmem:[#allocation7 + $0x30] sm:$0xff]
        %v477 = vld [vmem:[#allocation7 + $0x38] sm:$0xff]
        %v478 = vld [vmem:[#allocation7 + $0x40] sm:$0xff]
        %v479 = vld [vmem:[#allocation7 + $0x48] sm:$0xff]
        %v480 = vld [vmem:[#allocation7 + $0x50] sm:$0xff]
        %v481 = vld [vmem:[#allocation7 + $0x58] sm:$0xff]
        %v482 = vld [vmem:[#allocation7 + $0x60] sm:$0xff]
        %v483 = vld [vmem:[#allocation7 + $0x68] sm:$0xff]
        %v484 = vld [vmem:[#allocation7 + $0x70] sm:$0xff]
        %v485 = vld [vmem:[#allocation7 + $0x78] sm:$0xff]
        %v486 = vld [vmem:[#allocation7 + $0x80] sm:$0xff]
        %v487 = vld [vmem:[#allocation7 + $0x88] sm:$0xff]
        %v488 = vld [vmem:[#allocation7 + $0x90] sm:$0xff]
        %v489 = vld [vmem:[#allocation7 + $0x98] sm:$0xff]
        %v490 = vld [vmem:[#allocation7 + $0xa0] sm:$0xff]
        %v491 = vld [vmem:[#allocation7 + $0xa8] sm:$0xff]
        %v492 = vld [vmem:[#allocation7 + $0xb0] sm:$0xff]
        %v493 = vld [vmem:[#allocation7 + $0xb8] sm:$0xff]
        %v494 = vld [vmem:[#allocation7 + $0xc0] sm:$0xff]
        %v495 = vld [vmem:[#allocation7 + $0xc8] sm:$0xff]
        %v496 = vld [vmem:[#allocation7 + $0xd0] sm:$0xff]
        %v497 = vld [vmem:[#allocation7 + $0xd8] sm:$0xff]
        %v498 = vld [vmem:[#allocation7 + $0xe0] sm:$0xff]
        %v499 = vld [vmem:[#allocation7 + $0xe8] sm:$0xff]
        %v500 = vld [vmem:[#allocation7 + $0xf0] sm:$0xff]
        %v501 = vld [vmem:[#allocation7 + $0xf8] sm:$0xff]
        %v502 = vld [vmem:[#allocation7 + $0x100] sm:$0xff]
        %v503 = vld [vmem:[#allocation7 + $0x108] sm:$0xff]
        %v504 = vld [vmem:[#allocation7 + $0x110] sm:$0xff]
        %v505 = vld [vmem:[#allocation7 + $0x118] sm:$0xff]
        %v506 = vld [vmem:[#allocation7 + $0x120] sm:$0xff]
        %v507 = vld [vmem:[#allocation7 + $0x128] sm:$0xff]
        %v508 = vld [vmem:[#allocation7 + $0x130] sm:$0xff]
        %v509 = vld [vmem:[#allocation7 + $0x138] sm:$0xff]
        %v510 = vld [vmem:[#allocation7 + $0x140] sm:$0xff]
        %v511 = vld [vmem:[#allocation7 + $0x148] sm:$0xff]
        %v512 = vld [vmem:[#allocation7 + $0x150] sm:$0xff]
        %v513 = vld [vmem:[#allocation7 + $0x158] sm:$0xff]
        %v514 = vld [vmem:[#allocation7 + $0x160] sm:$0xff]
        %v515 = vld [vmem:[#allocation7 + $0x168] sm:$0xff]
        %v516 = vld [vmem:[#allocation7 + $0x170] sm:$0xff]
        %v517 = vld [vmem:[#allocation7 + $0x178] sm:$0xff]
        %v518 = vld [vmem:[#allocation7 + $0x180] sm:$0xff]
        %v519 = vld [vmem:[#allocation7 + $0x188] sm:$0xff]
        %v520 = vld [vmem:[#allocation7 + $0x190] sm:$0xff]
        %v521 = vld [vmem:[#allocation7 + $0x198] sm:$0xff]
        %v522 = vld [vmem:[#allocation7 + $0x1a0] sm:$0xff]
        %v523 = vld [vmem:[#allocation7 + $0x1a8] sm:$0xff]
        %v524 = vld [vmem:[#allocation7 + $0x1b0] sm:$0xff]
        %v525 = vld [vmem:[#allocation7 + $0x1b8] sm:$0xff]
        %v526 = vld [vmem:[#allocation7 + $0x1c0] sm:$0xff]
        %v527 = vld [vmem:[#allocation7 + $0x1c8] sm:$0xff]
        %v528 = vld [vmem:[#allocation7 + $0x1d0] sm:$0xff]
        %v529 = vld [vmem:[#allocation7 + $0x1d8] sm:$0xff]
        %v530 = vld [vmem:[#allocation7 + $0x1e0] sm:$0xff]
        %v531 = vld [vmem:[#allocation7 + $0x1e8] sm:$0xff]
        %v532 = vld [vmem:[#allocation7 + $0x1f0] sm:$0xff]
        %v533 = vld [vmem:[#allocation7 + $0x1f8] sm:$0xff]
        %v534 = vld [vmem:[%s4] sm:$0x3]
        %v536 = vlaneseq
        %v537 = vshrl.u32 %v536, 7
        %v538 = vsub.s32 0, %v537
        %v539 = vrot.slane %v534, %v538
        %v540 = vlaneseq
        %v541 = vshrl.u32 %v540, 7
        %v542 = vsub.s32 1, %v541
        %v543 = vrot.slane %v534, %v542
        %546 = vmatprep.subr.mxu0 %v501
        %547 = vmatpush1.msra.mxu0 %v500
        %548 = vmatprep.subr.mxu0 %v499
        %549 = vmatpush1.msra.mxu0 %v498
        %550 = vmatprep.subr.mxu0 %v497
        %551 = vmatpush1.msra.mxu0 %v496
        %552 = vmatprep.subr.mxu0 %v495
        %553 = vmatpush1.msra.mxu0 %v494
        %554 = vmatprep.subr.mxu0 %v493
        %555 = vmatpush1.msra.mxu0 %v492
        %556 = vmatprep.subr.mxu0 %v491
        %557 = vmatpush1.msra.mxu0 %v490
        %558 = vmatprep.subr.mxu0 %v489
        %559 = vmatpush1.msra.mxu0 %v488
        %560 = vmatprep.subr.mxu0 %v487
        %561 = vmatpush1.msra.mxu0 %v486
        %562 = vmatprep.subr.mxu0 %v485
        %563 = vmatpush1.msra.mxu0 %v484
        %564 = vmatprep.subr.mxu0 %v483
        %565 = vmatpush1.msra.mxu0 %v482
        %566 = vmatprep.subr.mxu0 %v481
        %567 = vmatpush1.msra.mxu0 %v480
        %568 = vmatprep.subr.mxu0 %v479
        %569 = vmatpush1.msra.mxu0 %v478
        %570 = vmatprep.subr.mxu0 %v477
        %571 = vmatpush1.msra.mxu0 %v476
        %572 = vmatprep.subr.mxu0 %v475
        %573 = vmatpush1.msra.mxu0 %v474
        %574 = vmatprep.subr.mxu0 %v473
        %575 = vmatpush1.msra.mxu0 %v472
        %576 = vmatprep.subr.mxu0 %v471
        %577 = vmatpush1.msra.mxu0 %v470
        %578 = vmatprep.subr.mxu0 %v533
        %579 = vmatpush2.msra.mxu0 %v532
        %580 = vmatprep.subr.mxu0 %v531
        %581 = vmatpush2.msra.mxu0 %v530
        %582 = vmatprep.subr.mxu0 %v529
        %583 = vmatpush2.msra.mxu0 %v528
        %584 = vmatprep.subr.mxu0 %v527
        %585 = vmatpush2.msra.mxu0 %v526
        %586 = vmatprep.subr.mxu0 %v525
        %587 = vmatpush2.msra.mxu0 %v524
        %588 = vmatprep.subr.mxu0 %v523
        %589 = vmatpush2.msra.mxu0 %v522
        %590 = vmatprep.subr.mxu0 %v521
        %591 = vmatpush2.msra.mxu0 %v520
        %592 = vmatprep.subr.mxu0 %v519
        %593 = vmatpush2.msra.mxu0 %v518
        %594 = vmatprep.subr.mxu0 %v517
        %595 = vmatpush2.msra.mxu0 %v516
        %596 = vmatprep.subr.mxu0 %v515
        %597 = vmatpush2.msra.mxu0 %v514
        %598 = vmatprep.subr.mxu0 %v513
        %599 = vmatpush2.msra.mxu0 %v512
        %600 = vmatprep.subr.mxu0 %v511
        %601 = vmatpush2.msra.mxu0 %v510
        %602 = vmatprep.subr.mxu0 %v509
        %603 = vmatpush2.msra.mxu0 %v508
        %604 = vmatprep.subr.mxu0 %v507
        %605 = vmatpush2.msra.mxu0 %v506
        %606 = vmatprep.subr.mxu0 %v505
        %607 = vmatpush2.msra.mxu0 %v504
        %608 = vmatprep.subr.mxu0 %v503
        %609 = vmatpush2.msra.mxu0 %v502
        %610 = vmatprep.mubr.f32.mxu0 %v467
        %611 = vmatmul.mubr.f32.gmra.mxu0 %v466
        %v612 = vpop.f32.mrf.mxu0
        %v613 = vadd.f32 %v539, %v612
        %v614 = vpop.f32.mrf.mxu0
        %v615 = vadd.f32 %v543, %v614
        %616 = vmatprep.mubr.f32.mxu0 %v469
        %617 = vmatmul.mubr.f32.gmra.mxu0 %v468
        %v618 = vpop.f32.mrf.mxu0
        %v619 = vadd.f32 %v539, %v618
        %v620 = vpop.f32.mrf.mxu0
        %v621 = vadd.f32 %v543, %v620
        %622 = vdwg.mxu0
        %v623 = vmax.f32 %v613, 0.0
        %v624 = vmax.f32 %v615, 0.0
        %v625 = vmax.f32 %v619, 0.0
        %v626 = vmax.f32 %v621, 0.0
        %v627 = vld [vmem:[#allocation8] sm:$0xff]
        %v628 = vld [vmem:[#allocation8 + $0x8] sm:$0xff]
        %v629 = vld [vmem:[#allocation8 + $0x10] sm:$0xff]
        %v630 = vld [vmem:[#allocation8 + $0x18] sm:$0xff]
        %v631 = vld [vmem:[#allocation8 + $0x20] sm:$0xff]
        %v632 = vld [vmem:[#allocation8 + $0x28] sm:$0xff]
        %v633 = vld [vmem:[#allocation8 + $0x30] sm:$0xff]
        %v634 = vld [vmem:[#allocation8 + $0x38] sm:$0xff]
        %v635 = vld [vmem:[#allocation8 + $0x40] sm:$0xff]
        %v636 = vld [vmem:[#allocation8 + $0x48] sm:$0xff]
        %v637 = vld [vmem:[#allocation8 + $0x50] sm:$0xff]
        %v638 = vld [vmem:[#allocation8 + $0x58] sm:$0xff]
        %v639 = vld [vmem:[#allocation8 + $0x60] sm:$0xff]
        %v640 = vld [vmem:[#allocation8 + $0x68] sm:$0xff]
        %v641 = vld [vmem:[#allocation8 + $0x70] sm:$0xff]
        %v642 = vld [vmem:[#allocation8 + $0x78] sm:$0xff]
        %v643 = vld [vmem:[#allocation8 + $0x80] sm:$0xff]
        %v644 = vld [vmem:[#allocation8 + $0x88] sm:$0xff]
        %v645 = vld [vmem:[#allocation8 + $0x90] sm:$0xff]
        %v646 = vld [vmem:[#allocation8 + $0x98] sm:$0xff]
        %v647 = vld [vmem:[#allocation8 + $0xa0] sm:$0xff]
        %v648 = vld [vmem:[#allocation8 + $0xa8] sm:$0xff]
        %v649 = vld [vmem:[#allocation8 + $0xb0] sm:$0xff]
        %v650 = vld [vmem:[#allocation8 + $0xb8] sm:$0xff]
        %v651 = vld [vmem:[#allocation8 + $0xc0] sm:$0xff]
        %v652 = vld [vmem:[#allocation8 + $0xc8] sm:$0xff]
        %v653 = vld [vmem:[#allocation8 + $0xd0] sm:$0xff]
        %v654 = vld [vmem:[#allocation8 + $0xd8] sm:$0xff]
        %v655 = vld [vmem:[#allocation8 + $0xe0] sm:$0xff]
        %v656 = vld [vmem:[#allocation8 + $0xe8] sm:$0xff]
        %v657 = vld [vmem:[#allocation8 + $0xf0] sm:$0xff]
        %v658 = vld [vmem:[#allocation8 + $0xf8] sm:$0xff]
        %v659 = vld [vmem:[%s6] sm:$0x1]
        %v661 = vlaneseq
        %v662 = vshrl.u32 %v661, 7
        %v663 = vsub.s32 0, %v662
        %v664 = vrot.slane %v659, %v663
        %666 = vmatprep.subr.mxu0 0.0
        %667 = vmatpush1.msra.mxu0 %v642
        %668 = vmatprep.subr.mxu0 0.0
        %669 = vmatpush1.msra.mxu0 %v641
        %670 = vmatprep.subr.mxu0 0.0
        %671 = vmatpush1.msra.mxu0 %v640
        %672 = vmatprep.subr.mxu0 0.0
        %673 = vmatpush1.msra.mxu0 %v639
        %674 = vmatprep.subr.mxu0 0.0
        %675 = vmatpush1.msra.mxu0 %v638
        %676 = vmatprep.subr.mxu0 0.0
        %677 = vmatpush1.msra.mxu0 %v637
        %678 = vmatprep.subr.mxu0 0.0
        %679 = vmatpush1.msra.mxu0 %v636
        %680 = vmatprep.subr.mxu0 0.0
        %681 = vmatpush1.msra.mxu0 %v635
        %682 = vmatprep.subr.mxu0 0.0
        %683 = vmatpush1.msra.mxu0 %v634
        %684 = vmatprep.subr.mxu0 0.0
        %685 = vmatpush1.msra.mxu0 %v633
        %686 = vmatprep.subr.mxu0 0.0
        %687 = vmatpush1.msra.mxu0 %v632
        %688 = vmatprep.subr.mxu0 0.0
        %689 = vmatpush1.msra.mxu0 %v631
        %690 = vmatprep.subr.mxu0 0.0
        %691 = vmatpush1.msra.mxu0 %v630
        %692 = vmatprep.subr.mxu0 0.0
        %693 = vmatpush1.msra.mxu0 %v629
        %694 = vmatprep.subr.mxu0 0.0
        %695 = vmatpush1.msra.mxu0 %v628
        %696 = vmatprep.subr.mxu0 0.0
        %697 = vmatpush1.msra.mxu0 %v627
        %698 = vmatprep.subr.mxu0 0.0
        %699 = vmatpush2.msra.mxu0 %v658
        %700 = vmatprep.subr.mxu0 0.0
        %701 = vmatpush2.msra.mxu0 %v657
        %702 = vmatprep.subr.mxu0 0.0
        %703 = vmatpush2.msra.mxu0 %v656
        %704 = vmatprep.subr.mxu0 0.0
        %705 = vmatpush2.msra.mxu0 %v655
        %706 = vmatprep.subr.mxu0 0.0
        %707 = vmatpush2.msra.mxu0 %v654
        %708 = vmatprep.subr.mxu0 0.0
        %709 = vmatpush2.msra.mxu0 %v653
        %710 = vmatprep.subr.mxu0 0.0
        %711 = vmatpush2.msra.mxu0 %v652
        %712 = vmatprep.subr.mxu0 0.0
        %713 = vmatpush2.msra.mxu0 %v651
        %714 = vmatprep.subr.mxu0 0.0
        %715 = vmatpush2.msra.mxu0 %v650
        %716 = vmatprep.subr.mxu0 0.0
        %717 = vmatpush2.msra.mxu0 %v649
        %718 = vmatprep.subr.mxu0 0.0
        %719 = vmatpush2.msra.mxu0 %v648
        %720 = vmatprep.subr.mxu0 0.0
        %721 = vmatpush2.msra.mxu0 %v647
        %722 = vmatprep.subr.mxu0 0.0
        %723 = vmatpush2.msra.mxu0 %v646
        %724 = vmatprep.subr.mxu0 0.0
        %725 = vmatpush2.msra.mxu0 %v645
        %726 = vmatprep.subr.mxu0 0.0
        %727 = vmatpush2.msra.mxu0 %v644
        %728 = vmatprep.subr.mxu0 0.0
        %729 = vmatpush2.msra.mxu0 %v643
        %730 = vmatprep.mubr.f32.mxu0 %v624
        %731 = vmatmul.mubr.f32.gmra.mxu0 %v623
        %v732 = vpop.f32.mrf.mxu0
        %v733 = vadd.f32 %v664, %v732
        %v734 = vpop.f32.mrf.mxu0
        %735 = vmatprep.mubr.f32.mxu0 %v626
        %736 = vmatmul.mubr.f32.gmra.mxu0 %v625
        %v737 = vpop.f32.mrf.mxu0
        %v738 = vadd.f32 %v664, %v737
        %v739 = vpop.f32.mrf.mxu0
        %740 = vdwg.mxu0
        %741 = vst [vmem:[%s340] sm:$0xff] %v733
        %742 = vst [vmem:[%s340 + $0x8] sm:$0xff] %v738
        %s743 = sand.u32 %s186, 1
        %s744 = scalar_lea.sflag [#allocation4], %s743
        %s745 = sand.u32 %s186, 1
        %s746 = smul.addr %s745, 16
        %s747 = scalar_lea.vmem [#allocation10], %s746
        // Predicated region
        $region65: #{tpu_custom_call.1} parent=47 // pred_check
          %p748 = pneg %p196
        $region66: #{tpu_custom_call.1} parent=47 // pred_check_branch
          %750 = sbr.rel (%p748) target = $region68
        $region67: #{tpu_custom_call.1} parent=47 // pred_region
          %s751 = smul.u32 2, %s26
          %s753 = ssub.s32 256, 256
          %754 = vsyncadd %s744, %s753
          %s755 = smul.addr %s751, 128
          %s756 = scalar_lea.hbm %s7, %s755
          %s757 = sshll.u32 %s747, 4
          %s758 = int_to_ptr.vmem [resolvable:$true] %s757
          %763 = dma.vmem_to_hbm [thread:$0]  %s758, 256, %s756, %s744, 128, 128, 8
        $region68: #{tpu_custom_call.1} parent=47 // pred_fallthru
          _
      $region48: #{tpu_custom_call.1} parent=5 // pred_fallthru
        _
      %p764 = scmp.le.s32.totalorder 2, %s21
      // Predicated region
      $region69: #{tpu_custom_call.1} parent=5 // pred_check
        %p765 = pneg %p764
      $region70: #{tpu_custom_call.1} parent=5 // pred_check_branch
        %767 = sbr.rel (%p765) target = $region72
      $region71: #{tpu_custom_call.1} parent=5 // pred_region
        %s768 = ssub.s32 %s21, 2
        // Predicated region
        $region73: #{tpu_custom_call.1} parent=71 // pred_check
          %p769 = pneg %p202
        $region74: #{tpu_custom_call.1} parent=71 // pred_check_branch
          %771 = sbr.rel (%p769) target = $region76
        $region75: #{tpu_custom_call.1} parent=71 // pred_region
          %s772 = sand.u32 %s187, 1
          %s773 = scalar_lea.sflag [#allocation4], %s772
          %s774 = sand.u32 %s187, 1
          %s775 = smul.addr %s774, 16
          %s776 = scalar_lea.vmem [#allocation10], %s775
          %777 = dma.done %s773, 256
        $region76: #{tpu_custom_call.1} parent=71 // pred_fallthru
          _
      $region72: #{tpu_custom_call.1} parent=5 // pred_fallthru
        _
    $region6: #{tpu_custom_call.1} parent=1 // loop_footer
      %s25 = sadd.s32 1, %s21
    $region7: #{tpu_custom_call.1} parent=1 // loop_footer_branch
      %20 = sbr.rel target = $region3
    $region8: #{tpu_custom_call.1} parent=1 // loop_exit
      _
    %778 = vsyncpa [#allocation3], 1
    %s779 = scalar_lea.sflag [#allocation3], 1
    %780 = vsyncpa %s779, 1
    %781 = vsyncpa [#allocation6], 1
    %782 = vsyncpa [#allocation9], 1
    %783 = vsyncpa [#allocation4], 1
    %s784 = scalar_lea.sflag [#allocation4], 1
    %785 = vsyncpa %s784, 1

</llo_original>
